<compile_context>
chip_gen: v6e
topology: v6e:2x2x1
jax: 0.10.0
libtpu: 0.0.40
codegen_flags: <defaults>
</compile_context>

<pallas_src>
import functools

import jax
import jax.numpy as jnp
from jax.experimental import pallas as pl
from jax.experimental.pallas import tpu as pltpu


def _conv1x1_kernel(x_ref, w_ref, b_ref, o_ref, *, activate: bool, nb: int,
                    cout: int):
    # x_ref: (nb, Cin, tile_hw)   w_ref: (Cout_pad, Cin)   b_ref: (Cout_pad, 1)
    # o_ref: (nb, Cout, tile_hw)  -- lane-dense output block.
    w = w_ref[...]                              # resident, loaded once
    b = b_ref[...].astype(jnp.float32)
    for i in range(nb):                         # small, statically unrolled
        acc = jnp.dot(w, x_ref[i], preferred_element_type=jnp.float32)
        acc = acc + b
        if activate:
            acc = jax.nn.sigmoid(acc)
        # Drop the zero-padded rows before the store; HBM bytes unchanged.
        o_ref[i] = acc[:cout].astype(o_ref.dtype)


def _pick_tiling(N, HW, Cin, Cout, Cout_pad, itemsize,
                 target_bytes_per_step, vmem_budget_bytes):
    """Choose (nb images per step, HW tile) from streamed bytes + VMEM budget."""
    bytes_per_hw = (Cin + Cout) * itemsize          # streamed x+out per HW elem
    const_bytes = Cin * Cout_pad * 4 + Cout_pad * 4  # resident weight + bias

    if HW > 128 and HW * bytes_per_hw >= target_bytes_per_step:
        # Large images: one image per step, lane-aligned HW tile.
        # VMEM per HW element: 2 pipeline buffers for streamed x and out plus
        # ~3 f32 (Cout_pad-tall) intermediates (acc / activation temps).
        per_hw_vmem = 2 * bytes_per_hw + 3 * Cout_pad * 4
        budget_tile = max(128, (vmem_budget_bytes - const_bytes) // per_hw_vmem)
        tile = min(HW, target_bytes_per_step // bytes_per_hw, budget_tile)
        tile = max(128, (tile // 128) * 128)
        # Keep >=4 grid steps (memory-bound => both v7x TCs must see work),
        # but never shrink below ~1 MiB streamed per step.
        min_tile = max(128, (((1 << 20) // bytes_per_hw) // 128) * 128)
        while tile > min_tile and N * pl.cdiv(HW, tile) < 4:
            tile = max(min_tile, ((tile // 2) // 128) * 128)
        return 1, tile

    # Small images: full spatial extent per image; block the batch axis to
    # amortize the fixed per-grid-step overhead over several images.
    tile = HW
    nb = max(1, target_bytes_per_step // max(1, HW * bytes_per_hw))
    budget_nb = max(1, (vmem_budget_bytes - const_bytes - 3 * tile * Cout_pad * 4)
                    // max(1, 2 * tile * bytes_per_hw))
    nb = int(min(nb, budget_nb, N, 16))   # cap unroll length / compile time
    return nb, tile


def activated_output_conv2d(x, weight, bias, *, activate: bool = True,
                            target_bytes_per_step: int = 6 << 20,
                            vmem_budget_bytes: int = 36 << 20,
                            vmem_limit_bytes: int = 48 << 20):
    """x: (N, Cin, H, W); weight: (Cout, Cin, 1, 1); bias: (Cout,). Returns NCHW."""
    N, Cin, H, W = x.shape
    Cout = weight.shape[0]
    HW = H * W
    itemsize = jnp.dtype(x.dtype).itemsize

    # Zero-pad weight/bias rows to a full 8-sublane tile (MXU LHS + f32 acc
    # become full vreg tiles; no masked-sublane relayouts around (3, Cin)).
    Cout_pad = max(8, ((Cout + 7) // 8) * 8)
    w2 = jnp.zeros((Cout_pad, Cin), dtype=weight.dtype).at[:Cout].set(
        weight.reshape(Cout, Cin))
    b2 = jnp.zeros((Cout_pad, 1), dtype=bias.dtype).at[:Cout, 0].set(bias)

    # Layout plumbing: reshape only, no transposes / extra HBM traffic.
    x3 = x.reshape(N, Cin, HW)

    nb, tile_hw = _pick_tiling(N, HW, Cin, Cout, Cout_pad, itemsize,
                               target_bytes_per_step, vmem_budget_bytes)

    grid = (pl.cdiv(N, nb), pl.cdiv(HW, tile_hw))

    cost = pl.CostEstimate(
        flops=2 * N * HW * Cin * Cout,
        transcendentals=(N * HW * Cout) if activate else 0,
        bytes_accessed=itemsize * (N * HW * Cin + N * HW * Cout)
                       + 4 * (Cin * Cout + Cout),
    )

    out3 = pl.pallas_call(
        functools.partial(_conv1x1_kernel, activate=activate, nb=nb, cout=Cout),
        out_shape=jax.ShapeDtypeStruct((N, Cout, HW), x.dtype),
        grid=grid,
        in_specs=[
            pl.BlockSpec((nb, Cin, tile_hw), lambda n, j: (n, 0, j)),
            pl.BlockSpec((Cout_pad, Cin), lambda n, j: (0, 0)),   # resident
            pl.BlockSpec((Cout_pad, 1), lambda n, j: (0, 0)),     # resident
        ],
        out_specs=pl.BlockSpec((nb, Cout, tile_hw), lambda n, j: (n, 0, j)),
        compiler_params=pltpu.CompilerParams(
            dimension_semantics=("parallel", "parallel"),
            vmem_limit_bytes=vmem_limit_bytes),
        cost_estimate=cost,
    )(x3, w2, b2)

    return out3.reshape(N, Cout, H, W)


def _reference(x, weight, bias, activate=True):
    # Pure-JAX reference of nn.Conv2d(kernel_size=1) + Sigmoid on NCHW.
    out = jnp.einsum("nchw,oc->nohw", x,
                     weight.reshape(weight.shape[0], weight.shape[1]))
    out = out + bias[None, :, None, None]
    return jax.nn.sigmoid(out) if activate else out


if __name__ == "__main__":
    key = jax.random.PRNGKey(0)
    kx, kw, kb = jax.random.split(key, 3)

    # Shapes consistent with the module: batch=2, input_channels=4,
    # spatial=16x16, num_classes=3.
    N, Cin, H, W = 2, 4, 16, 16
    num_classes = 3

    x = jax.random.normal(kx, (N, Cin, H, W), dtype=jnp.float32)
    weight = jax.random.normal(kw, (num_classes, Cin, 1, 1), dtype=jnp.float32) * 0.1
    bias = jax.random.normal(kb, (num_classes,), dtype=jnp.float32) * 0.1

    # Main case (batch-blocked, full-spatial tile).
    out = activated_output_conv2d(x, weight, bias, activate=True)
    out = jax.block_until_ready(out)
    ref = _reference(x, weight, bias, activate=True)
    assert out.shape == (N, num_classes, H, W)
    assert jnp.allclose(out, ref, atol=1e-5, rtol=1e-5)

    # Non-128-multiple spatial size (H*W=225) and odd batch (masked boundary).
    x2 = jax.random.normal(kx, (3, Cin, 15, 15), dtype=jnp.float32)
    out2 = jax.block_until_ready(activated_output_conv2d(x2, weight, bias))
    assert jnp.allclose(out2, _reference(x2, weight, bias), atol=1e-5, rtol=1e-5)

    # Exercise the HW-tiled (large-image) path with a reduced per-step target,
    # including a padded boundary tile (4096 = 2304 + 1792).
    x3 = jax.random.normal(kx, (2, Cin, 64, 64), dtype=jnp.float32)
    out3 = jax.block_until_ready(
        activated_output_conv2d(x3, weight, bias, target_bytes_per_step=64 << 10))
    assert jnp.allclose(out3, _reference(x3, weight, bias), atol=1e-5, rtol=1e-5)

    # activate=False path (nn.Identity).
    out4 = jax.block_until_ready(
        activated_output_conv2d(x, weight, bias, activate=False))
    assert jnp.allclose(out4, _reference(x, weight, bias, activate=False),
                        atol=1e-5, rtol=1e-5)

    print("KERNEL_OK")
</pallas_src>

<mosaic_0001>
module attributes {stable_mosaic.version = 11 : i64} {
  func.func @_conv1x1_kernel(%arg0: i32, %arg1: i32, %arg2: memref<2x4x256xf32, #tpu.memory_space<vmem>>, %arg3: memref<8x4xf32, #tpu.memory_space<vmem>>, %arg4: memref<8x1xf32, #tpu.memory_space<vmem>>, %arg5: memref<2x3x256xf32, #tpu.memory_space<vmem>>) attributes {dimension_semantics = [#tpu.dimension_semantics<parallel>, #tpu.dimension_semantics<parallel>], iteration_bounds = array<i64: 1, 1>, scalar_prefetch = 0 : i64, scratch_operands = 0 : i64, tpu.core_type = #tpu.core_type<tc>, window_params = [{transform_indices = @transform_0, window_bounds = array<i64: 2, 4, 256>}, {pipeline_mode = #tpu.pipeline_mode<synchronous>, transform_indices = @transform_1, window_bounds = array<i64: 8, 4>}, {pipeline_mode = #tpu.pipeline_mode<synchronous>, transform_indices = @transform_2, window_bounds = array<i64: 8, 1>}, {transform_indices = @transform_3, window_bounds = array<i64: 2, 3, 256>}]} {
    %c0 = arith.constant 0 : index
    %c0_0 = arith.constant 0 : index
    %0 = vector.load %arg3[%c0, %c0_0] : memref<8x4xf32, #tpu.memory_space<vmem>>, vector<8x4xf32>
    %c0_1 = arith.constant 0 : index
    %c0_2 = arith.constant 0 : index
    %1 = vector.load %arg4[%c0_1, %c0_2] : memref<8x1xf32, #tpu.memory_space<vmem>>, vector<8x1xf32>
    %c0_3 = arith.constant 0 : index
    %c0_4 = arith.constant 0 : index
    %c0_5 = arith.constant 0 : index
    %2 = vector.load %arg2[%c0_3, %c0_4, %c0_5] : memref<2x4x256xf32, #tpu.memory_space<vmem>>, vector<1x4x256xf32>
    %3 = vector.shape_cast %2 : vector<1x4x256xf32> to vector<4x256xf32>
    %cst = arith.constant dense<0.000000e+00> : vector<8x256xf32>
    %4 = tpu.matmul %0, %3, %cst {dimension_numbers = #tpu.dot_dimension_numbers<[1], [0], [0], [1], [0, 0, 1, 1], [], []>} : vector<8x4xf32>, vector<4x256xf32>, vector<8x256xf32> -> vector<8x256xf32>
    %5 = vector.broadcast %1 : vector<8x1xf32> to vector<8x256xf32>
    %6 = arith.addf %4, %5 : vector<8x256xf32>
    %7 = arith.negf %6 : vector<8x256xf32>
    %8 = math.exp %7 : vector<8x256xf32>
    %cst_6 = arith.constant 1.000000e+00 : f32
    %9 = vector.broadcast %cst_6 : f32 to vector<8x256xf32>
    %10 = arith.addf %9, %8 : vector<8x256xf32>
    %11 = arith.divf %9, %10 : vector<8x256xf32>
    %12 = vector.extract_strided_slice %11 {offsets = [0, 0], sizes = [3, 256], strides = [1, 1]} : vector<8x256xf32> to vector<3x256xf32>
    %c0_7 = arith.constant 0 : index
    %c0_8 = arith.constant 0 : index
    %c0_9 = arith.constant 0 : index
    %13 = vector.load %arg5[%c0_7, %c0_8, %c0_9] : memref<2x3x256xf32, #tpu.memory_space<vmem>>, vector<1x3x256xf32>
    %14 = vector.shape_cast %13 : vector<1x3x256xf32> to vector<3x256xf32>
    %15 = vector.shape_cast %12 : vector<3x256xf32> to vector<1x3x256xf32>
    tpu.vector_store %arg5[%c0_7, %c0_8, %c0_9], %15 {strides = array<i32>} : memref<2x3x256xf32, #tpu.memory_space<vmem>>, vector<1x3x256xf32>,
    %c1 = arith.constant 1 : index
    %c0_10 = arith.constant 0 : index
    %c0_11 = arith.constant 0 : index
    %16 = vector.load %arg2[%c1, %c0_10, %c0_11] : memref<2x4x256xf32, #tpu.memory_space<vmem>>, vector<1x4x256xf32>
    %17 = vector.shape_cast %16 : vector<1x4x256xf32> to vector<4x256xf32>
    %cst_12 = arith.constant dense<0.000000e+00> : vector<8x256xf32>
    %18 = tpu.matmul %0, %17, %cst_12 {dimension_numbers = #tpu.dot_dimension_numbers<[1], [0], [0], [1], [0, 0, 1, 1], [], []>} : vector<8x4xf32>, vector<4x256xf32>, vector<8x256xf32> -> vector<8x256xf32>
    %19 = vector.broadcast %1 : vector<8x1xf32> to vector<8x256xf32>
    %20 = arith.addf %18, %19 : vector<8x256xf32>
    %21 = arith.negf %20 : vector<8x256xf32>
    %22 = math.exp %21 : vector<8x256xf32>
    %cst_13 = arith.constant 1.000000e+00 : f32
    %23 = vector.broadcast %cst_13 : f32 to vector<8x256xf32>
    %24 = arith.addf %23, %22 : vector<8x256xf32>
    %25 = arith.divf %23, %24 : vector<8x256xf32>
    %26 = vector.extract_strided_slice %25 {offsets = [0, 0], sizes = [3, 256], strides = [1, 1]} : vector<8x256xf32> to vector<3x256xf32>
    %c1_14 = arith.constant 1 : index
    %c0_15 = arith.constant 0 : index
    %c0_16 = arith.constant 0 : index
    %27 = vector.load %arg5[%c1_14, %c0_15, %c0_16] : memref<2x3x256xf32, #tpu.memory_space<vmem>>, vector<1x3x256xf32>
    %28 = vector.shape_cast %27 : vector<1x3x256xf32> to vector<3x256xf32>
    %29 = vector.shape_cast %26 : vector<3x256xf32> to vector<1x3x256xf32>
    tpu.vector_store %arg5[%c1_14, %c0_15, %c0_16], %29 {strides = array<i32>} : memref<2x3x256xf32, #tpu.memory_space<vmem>>, vector<1x3x256xf32>,
    return
  }
  func.func @transform_0(%arg0: i32, %arg1: i32) -> (i32, i32, i32) {
    %c0_i32 = arith.constant 0 : i32
    %c0_i32_0 = arith.constant 0 : i32
    return %arg0, %c0_i32, %arg1 : i32, i32, i32
  }
  func.func @transform_1(%arg0: i32, %arg1: i32) -> (i32, i32) {
    %c0_i32 = arith.constant 0 : i32
    %c0_i32_0 = arith.constant 0 : i32
    %c0_i32_1 = arith.constant 0 : i32
    return %c0_i32, %c0_i32_0 : i32, i32
  }
  func.func @transform_2(%arg0: i32, %arg1: i32) -> (i32, i32) {
    %c0_i32 = arith.constant 0 : i32
    %c0_i32_0 = arith.constant 0 : i32
    %c0_i32_1 = arith.constant 0 : i32
    return %c0_i32, %c0_i32_0 : i32, i32
  }
  func.func @transform_3(%arg0: i32, %arg1: i32) -> (i32, i32, i32) {
    %c0_i32 = arith.constant 0 : i32
    %c0_i32_0 = arith.constant 0 : i32
    return %arg0, %c0_i32, %arg1 : i32, i32, i32
  }
}

</mosaic_0001>

<llo_original>
// kernel: tpu_custom_call.1
$region0: #{tpu_custom_call.1}
  #allocation0 [shape = 'u32[]', space=smem, size = 0x4, offset = 0x4, fixed_abs, tag = 'smem constant byte address 0x4 - core index']
  #allocation1 [shape = 'u32[144,128]{1,0:T(1,128)}', space=vmem, size = 0x12000, scoped, tag = 'internal scratch']
  %s0 = inlined_call_operand.vmem [shape: f32[2,4,256], index: 0, kind: input, shape index: {}]
  %s1 = inlined_call_operand.vmem [shape: f32[8,4], index: 1, kind: input, shape index: {}]
  %s2 = inlined_call_operand.vmem [shape: f32[8,1], index: 2, kind: input, shape index: {}]
  %s3 = inlined_call_operand.vmem [shape: f32[2,3,256], index: 3, kind: output, shape index: {}]
  %s4 = sld [smem:[#allocation0]]
  $region22: #{tpu_custom_call.1} parent=0
    _
  %s6 = ssub.s32 1, %s4
  %s7 = scalar_select 0, %s6, %s4
  // Predicated region
  $region2: #{tpu_custom_call.1} parent=0 // pred_check
    _
  $region3: #{tpu_custom_call.1} parent=0 // pred_check_branch
    %9 = sbr.rel (0) target = $region5
  $region4: #{tpu_custom_call.1} parent=0 // pred_region
    _
  $region5: #{tpu_custom_call.1} parent=0 // pred_fallthru
    _
  // Predicated region
  $region6: #{tpu_custom_call.1} parent=0 // pred_check
    _
  $region7: #{tpu_custom_call.1} parent=0 // pred_check_branch
    %11 = sbr.rel (0) target = $region9
  $region8: #{tpu_custom_call.1} parent=0 // pred_region
    _
  $region9: #{tpu_custom_call.1} parent=0 // pred_fallthru
    _
  // Predicated region
  $region10: #{tpu_custom_call.1} parent=0 // pred_check
    _
  $region11: #{tpu_custom_call.1} parent=0 // pred_check_branch
    %13 = sbr.rel (0) target = $region13
  $region12: #{tpu_custom_call.1} parent=0 // pred_region
    _
  $region13: #{tpu_custom_call.1} parent=0 // pred_fallthru
    _
  %v14 = vld [vmem:[%s1] sm:$0xff]
  %v15 = vld [vmem:[%s2] sm:$0xff]
  %v16 = vld [vmem:[%s0] sm:$0xff]
  %18 = vset.pattern.permute.xlu0 0
  %19 = vperm.xlu0 %18, %v15
  %v20 = vpop.permute.xlu0 %19
  %v23 = vcombine.high %v16, %v16
  %vm24 = vcmask 31744
  %v26 = vsel %vm24, %v14, 0
  %vm28 = vcmask 1043456
  %v29 = vsel %vm28, %v16, 0
  %v31 = vsel %vm28, %v23, 0
  %33 = vmatprep.subr.mxu0 0.0
  %34 = vmatpush1.msra.mxu0 0.0
  %35 = vmatprep.subr.mxu0 0.0
  %36 = vmatpush1.msra.mxu0 0.0
  %37 = vmatprep.subr.mxu0 0.0
  %38 = vmatpush1.msra.mxu0 0.0
  %39 = vmatprep.subr.mxu0 0.0
  %40 = vmatpush1.msra.mxu0 0.0
  %41 = vmatprep.subr.mxu0 0.0
  %42 = vmatpush1.msra.mxu0 0.0
  %43 = vmatprep.subr.mxu0 0.0
  %44 = vmatpush1.msra.mxu0 0.0
  %45 = vmatprep.subr.mxu0 0.0
  %46 = vmatpush1.msra.mxu0 0.0
  %47 = vmatprep.subr.mxu0 0.0
  %48 = vmatpush1.msra.mxu0 0.0
  %49 = vmatprep.subr.mxu0 0.0
  %50 = vmatpush1.msra.mxu0 0.0
  %51 = vmatprep.subr.mxu0 0.0
  %52 = vmatpush1.msra.mxu0 0.0
  %53 = vmatprep.subr.mxu0 0.0
  %54 = vmatpush1.msra.mxu0 0.0
  %55 = vmatprep.subr.mxu0 0.0
  %56 = vmatpush1.msra.mxu0 0.0
  %57 = vmatprep.subr.mxu0 0.0
  %58 = vmatpush1.msra.mxu0 0.0
  %59 = vmatprep.subr.mxu0 0.0
  %60 = vmatpush1.msra.mxu0 0.0
  %61 = vmatprep.subr.mxu0 0.0
  %62 = vmatpush1.msra.mxu0 0.0
  %63 = vmatprep.subr.mxu0 %v31
  %64 = vmatpush1.msra.mxu0 %v29
  %65 = vmatprep.subr.mxu0 0.0
  %66 = vmatpush2.msra.mxu0 0.0
  %67 = vmatprep.subr.mxu0 0.0
  %68 = vmatpush2.msra.mxu0 0.0
  %69 = vmatprep.subr.mxu0 0.0
  %70 = vmatpush2.msra.mxu0 0.0
  %71 = vmatprep.subr.mxu0 0.0
  %72 = vmatpush2.msra.mxu0 0.0
  %73 = vmatprep.subr.mxu0 0.0
  %74 = vmatpush2.msra.mxu0 0.0
  %75 = vmatprep.subr.mxu0 0.0
  %76 = vmatpush2.msra.mxu0 0.0
  %77 = vmatprep.subr.mxu0 0.0
  %78 = vmatpush2.msra.mxu0 0.0
  %79 = vmatprep.subr.mxu0 0.0
  %80 = vmatpush2.msra.mxu0 0.0
  %81 = vmatprep.subr.mxu0 0.0
  %82 = vmatpush2.msra.mxu0 0.0
  %83 = vmatprep.subr.mxu0 0.0
  %84 = vmatpush2.msra.mxu0 0.0
  %85 = vmatprep.subr.mxu0 0.0
  %86 = vmatpush2.msra.mxu0 0.0
  %87 = vmatprep.subr.mxu0 0.0
  %88 = vmatpush2.msra.mxu0 0.0
  %89 = vmatprep.subr.mxu0 0.0
  %90 = vmatpush2.msra.mxu0 0.0
  %91 = vmatprep.subr.mxu0 0.0
  %92 = vmatpush2.msra.mxu0 0.0
  %93 = vmatprep.subr.mxu0 0.0
  %94 = vmatpush2.msra.mxu0 0.0
  %95 = vmatprep.subr.mxu0 0.0
  %96 = vmatpush2.msra.mxu0 0.0
  %97 = vmatprep.mubr.f32.mxu0 0.0
  %98 = vmatmul.mubr.f32.gmra.mxu0 %v26
  %v99 = vpop.f32.mrf.mxu0
  %v100 = vadd.f32 %v20, %v99
  %v101 = vpop.f32.mrf.mxu0
  %v102 = vadd.f32 %v20, %v101
  %103 = vdwg.mxu0
  %v104 = vxor.u32 %v100, 2147483648
  %v105 = vxor.u32 %v102, 2147483648
  %v106 = vmul.f32 %v104, 1.442695
  %v107 = vpow.pop %v106
  %v108 = vmul.f32 %v105, 1.442695
  %v109 = vpow.pop %v108
  %v110 = vadd.f32 %v107, 1.0
  %v111 = vadd.f32 %v109, 1.0
  %v112 = vrcp.pop %v110
  %v113 = vmul.f32 1.0, %v112
  %v114 = vrcp.pop %v111
  %v115 = vmul.f32 1.0, %v114
  %v118 = vcombine.low %v113, %v115
  %120 = vst [vmem:[%s3] sm:$0x77] %v118
  %s121 = scalar_lea.vmem %s0, 8
  %v122 = vld [vmem:[%s121] sm:$0xff]
  %v124 = vcombine.high %v122, %v122
  %v125 = vsel %vm28, %v122, 0
  %v127 = vsel %vm28, %v124, 0
  %129 = vmatprep.subr.mxu0 0.0
  %130 = vmatpush1.msra.mxu0 0.0
  %131 = vmatprep.subr.mxu0 0.0
  %132 = vmatpush1.msra.mxu0 0.0
  %133 = vmatprep.subr.mxu0 0.0
  %134 = vmatpush1.msra.mxu0 0.0
  %135 = vmatprep.subr.mxu0 0.0
  %136 = vmatpush1.msra.mxu0 0.0
  %137 = vmatprep.subr.mxu0 0.0
  %138 = vmatpush1.msra.mxu0 0.0
  %139 = vmatprep.subr.mxu0 0.0
  %140 = vmatpush1.msra.mxu0 0.0
  %141 = vmatprep.subr.mxu0 0.0
  %142 = vmatpush1.msra.mxu0 0.0
  %143 = vmatprep.subr.mxu0 0.0
  %144 = vmatpush1.msra.mxu0 0.0
  %145 = vmatprep.subr.mxu0 0.0
  %146 = vmatpush1.msra.mxu0 0.0
  %147 = vmatprep.subr.mxu0 0.0
  %148 = vmatpush1.msra.mxu0 0.0
  %149 = vmatprep.subr.mxu0 0.0
  %150 = vmatpush1.msra.mxu0 0.0
  %151 = vmatprep.subr.mxu0 0.0
  %152 = vmatpush1.msra.mxu0 0.0
  %153 = vmatprep.subr.mxu0 0.0
  %154 = vmatpush1.msra.mxu0 0.0
  %155 = vmatprep.subr.mxu0 0.0
  %156 = vmatpush1.msra.mxu0 0.0
  %157 = vmatprep.subr.mxu0 0.0
  %158 = vmatpush1.msra.mxu0 0.0
  %159 = vmatprep.subr.mxu0 %v127
  %160 = vmatpush1.msra.mxu0 %v125
  %161 = vmatprep.subr.mxu0 0.0
  %162 = vmatpush2.msra.mxu0 0.0
  %163 = vmatprep.subr.mxu0 0.0
  %164 = vmatpush2.msra.mxu0 0.0
  %165 = vmatprep.subr.mxu0 0.0
  %166 = vmatpush2.msra.mxu0 0.0
  %167 = vmatprep.subr.mxu0 0.0
  %168 = vmatpush2.msra.mxu0 0.0
  %169 = vmatprep.subr.mxu0 0.0
  %170 = vmatpush2.msra.mxu0 0.0
  %171 = vmatprep.subr.mxu0 0.0
  %172 = vmatpush2.msra.mxu0 0.0
  %173 = vmatprep.subr.mxu0 0.0
  %174 = vmatpush2.msra.mxu0 0.0
  %175 = vmatprep.subr.mxu0 0.0
  %176 = vmatpush2.msra.mxu0 0.0
  %177 = vmatprep.subr.mxu0 0.0
  %178 = vmatpush2.msra.mxu0 0.0
  %179 = vmatprep.subr.mxu0 0.0
  %180 = vmatpush2.msra.mxu0 0.0
  %181 = vmatprep.subr.mxu0 0.0
  %182 = vmatpush2.msra.mxu0 0.0
  %183 = vmatprep.subr.mxu0 0.0
  %184 = vmatpush2.msra.mxu0 0.0
  %185 = vmatprep.subr.mxu0 0.0
  %186 = vmatpush2.msra.mxu0 0.0
  %187 = vmatprep.subr.mxu0 0.0
  %188 = vmatpush2.msra.mxu0 0.0
  %189 = vmatprep.subr.mxu0 0.0
  %190 = vmatpush2.msra.mxu0 0.0
  %191 = vmatprep.subr.mxu0 0.0
  %192 = vmatpush2.msra.mxu0 0.0
  %193 = vmatprep.mubr.f32.mxu0 0.0
  %194 = vmatmul.mubr.f32.gmra.mxu0 %v26
  %v195 = vpop.f32.mrf.mxu0
  %v196 = vadd.f32 %v20, %v195
  %v197 = vpop.f32.mrf.mxu0
  %v198 = vadd.f32 %v20, %v197
  %199 = vdwg.mxu0
  %v200 = vxor.u32 %v196, 2147483648
  %v201 = vxor.u32 %v198, 2147483648
  %v202 = vmul.f32 %v200, 1.442695
  %v203 = vpow.pop %v202
  %v204 = vmul.f32 %v201, 1.442695
  %v205 = vpow.pop %v204
  %v206 = vadd.f32 %v203, 1.0
  %v207 = vadd.f32 %v205, 1.0
  %v208 = vrcp.pop %v206
  %v209 = vmul.f32 1.0, %v208
  %v210 = vrcp.pop %v207
  %v211 = vmul.f32 1.0, %v210
  %v214 = vcombine.low %v209, %v211
  %s216 = scalar_lea.vmem %s3, 8
  %217 = vst [vmem:[%s216] sm:$0x77] %v214
  // Predicated region
  $region14: #{tpu_custom_call.1} parent=0 // pred_check
    _
  $region15: #{tpu_custom_call.1} parent=0 // pred_check_branch
    %219 = sbr.rel (0) target = $region17
  $region16: #{tpu_custom_call.1} parent=0 // pred_region
    _
  $region17: #{tpu_custom_call.1} parent=0 // pred_fallthru
    _
  // Predicated region
  $region18: #{tpu_custom_call.1} parent=0 // pred_check
    _
  $region19: #{tpu_custom_call.1} parent=0 // pred_check_branch
    %221 = sbr.rel (0) target = $region21
  $region20: #{tpu_custom_call.1} parent=0 // pred_region
    _
  $region21: #{tpu_custom_call.1} parent=0 // pred_fallthru
    _

</llo_original>
